<compile_context>
chip_gen: v5e
topology: v5e:2x2
jax: 0.10.0
libtpu: 0.0.40
codegen_flags: <defaults>
</compile_context>

<pallas_src>
import jax
import jax.numpy as jnp
import numpy as np
from jax.experimental import pallas as pl
from jax.experimental.pallas import tpu as pltpu

_SUBLANE = 8  # vreg sublane width -> batch-tile multiple


def _round_up(n, m):
    return (n + m - 1) // m * m


def _leaky_relu(h, slope=0.2):
    return jnp.where(h > 0, h, slope * h)


def _spec(shape, index_map, buffers=None):
    """BlockSpec with an optional explicit buffer count.

    Falls back to a plain BlockSpec if this jax version's BlockSpec does not
    accept pipeline_mode (keeps the script runnable everywhere)."""
    if buffers is not None:
        try:
            return pl.BlockSpec(shape, index_map, pipeline_mode=pl.Buffered(buffers))
        except TypeError:
            pass
    return pl.BlockSpec(shape, index_map)


def mlp_kernel(x_ref, w1_ref, b1_ref, w2_ref, b2_ref, w3_ref, b3_ref,
               w4_ref, b4_ref, o_ref):
    """One batch tile of the 4-layer MLP. Biases fp32; dots accumulate in fp32."""
    wdt = w1_ref.dtype
    h = x_ref[...]
    if h.dtype != wdt:          # no-op when activations are streamed in wdt
        h = h.astype(wdt)

    h = jnp.dot(h, w1_ref[...], preferred_element_type=jnp.float32) + b1_ref[...]
    h = _leaky_relu(h).astype(wdt)
    h = jnp.dot(h, w2_ref[...], preferred_element_type=jnp.float32) + b2_ref[...]
    h = _leaky_relu(h).astype(wdt)
    h = jnp.dot(h, w3_ref[...], preferred_element_type=jnp.float32) + b3_ref[...]
    h = _leaky_relu(h).astype(wdt)
    h = jnp.dot(h, w4_ref[...], preferred_element_type=jnp.float32) + b4_ref[...]

    o_ref[...] = h.astype(o_ref.dtype)


def mlp_forward(x, params, *, block_rows=512, weight_dtype=None, out_dtype=None,
                vmem_limit_bytes=None):
    """4-layer MLP forward via a single batch-tiled pallas_call.

    x: (B, nin).  params: w1..w4 shaped (in, out), b1..b4 shaped (1, out).
    block_rows: target batch tile size (balanced-split; pick 1024-2048 on v6e
                for very large batches, smaller on v7x/v5e if VMEM-bound).
    weight_dtype: e.g. jnp.bfloat16 — halves weight+activation DMA/VMEM on all
                  generations; MXU still accumulates fp32.
    """
    B, nin = x.shape
    nh = params["w1"].shape[1]
    nout = params["w4"].shape[1]
    wdt = np.dtype(weight_dtype) if weight_dtype is not None else params["w1"].dtype
    odt = np.dtype(out_dtype) if out_dtype is not None else x.dtype

    if B == 0:  # degenerate batch guard
        return jnp.zeros((0, nout), odt)

    # Balanced batch tiling: minimal ragged-batch padding (<8 rows per tile).
    n_tiles = max(1, pl.cdiv(B, block_rows))
    # TODO(synk): on v7x, bump n_tiles to an even count >= 4 for large B so
    # dimension_semantics=("parallel",) keeps both TensorCores busy.
    tb = _round_up(pl.cdiv(B, n_tiles), _SUBLANE)
    b_p = n_tiles * tb

    # Stream activations in the weight dtype (halves the only pipelined HBM
    # traffic when wdt is bf16); pad the batch only if strictly needed.
    x_in = x if x.dtype == wdt else x.astype(wdt)
    if b_p != B:
        x_in = jnp.pad(x_in, ((0, b_p - B), (0, 0)))

    w1 = params["w1"].astype(wdt)
    w2 = params["w2"].astype(wdt)
    w3 = params["w3"].astype(wdt)
    w4 = params["w4"].astype(wdt)
    b1 = params["b1"].astype(jnp.float32)
    b2 = params["b2"].astype(jnp.float32)
    b3 = params["b3"].astype(jnp.float32)
    b4 = params["b4"].astype(jnp.float32)

    def act_spec(cols):                       # batch-tiled activation blocks
        return _spec((tb, cols), lambda i: (i, 0))

    def res_spec(shape):                      # VMEM-resident, single-buffered
        return _spec(shape, lambda i: (0, 0), buffers=1)

    in_specs = [
        act_spec(nin),
        res_spec((nin, nh)),  res_spec((1, nh)),
        res_spec((nh, nh)),   res_spec((1, nh)),
        res_spec((nh, nh)),   res_spec((1, nh)),
        res_spec((nh, nout)), res_spec((1, nout)),
    ]
    out_specs = act_spec(nout)

    if vmem_limit_bytes is None:
        # Explicit scoped-VMEM budget from the actual footprint (+2x margin),
        # clamped so it clears v5e's 16 MiB default without requesting more
        # than a v7x TC can physically hold for big configs.
        wb = np.dtype(wdt).itemsize
        ob = np.dtype(odt).itemsize
        est = ((nin * nh + 2 * nh * nh + nh * nout) * wb      # resident weights (1x buffered)
               + (3 * nh + nout) * 4                          # resident biases (fp32)
               + 2 * tb * (nin * wb + nout * ob)              # double-buffered x / out tiles
               + 4 * tb * nh * 4)                             # live fp32 intermediates headroom
        vmem_limit_bytes = int(min(max(2 * est, 32 * 1024 * 1024),
                                   100 * 1024 * 1024))

    out_p = pl.pallas_call(
        mlp_kernel,
        grid=(n_tiles,),
        out_shape=jax.ShapeDtypeStruct((b_p, nout), odt),
        in_specs=in_specs,
        out_specs=out_specs,
        compiler_params=pltpu.CompilerParams(
            dimension_semantics=("parallel",),   # megacore-shard batch tiles (v7x)
            vmem_limit_bytes=vmem_limit_bytes,
        ),
    )(x_in, w1, b1, w2, b2, w3, b3, w4, b4)

    return out_p if b_p == B else out_p[:B]


def init_params(key, nin, nout, nh):
    """nn.Linear-style init (uniform +/- 1/sqrt(fan_in)); weights stored (in, out)."""
    def linear(key, fan_in, fan_out):
        kw, kb = jax.random.split(key)
        bound = 1.0 / jnp.sqrt(fan_in)
        w = jax.random.uniform(kw, (fan_in, fan_out), jnp.float32, -bound, bound)
        b = jax.random.uniform(kb, (1, fan_out), jnp.float32, -bound, bound)
        return w, b

    k1, k2, k3, k4 = jax.random.split(key, 4)
    w1, b1 = linear(k1, nin, nh)
    w2, b2 = linear(k2, nh, nh)
    w3, b3 = linear(k3, nh, nh)
    w4, b4 = linear(k4, nh, nout)
    return dict(w1=w1, b1=b1, w2=w2, b2=b2, w3=w3, b3=b3, w4=w4, b4=b4)


def mlp_reference(x, p):
    def leaky(h):
        return jnp.where(h > 0, h, 0.2 * h)
    h = leaky(x @ p["w1"] + p["b1"])
    h = leaky(h @ p["w2"] + p["b2"])
    h = leaky(h @ p["w3"] + p["b3"])
    return h @ p["w4"] + p["b4"]


if __name__ == "__main__":
    nin, nout, nh = 4, 4, 32

    key = jax.random.PRNGKey(0)
    kx, kp, kx2 = jax.random.split(key, 3)
    params = init_params(kp, nin, nout, nh)

    # 1) small batch, fp32 weights (exact semantics, single tile, zero padding)
    batch = 8
    x = jax.random.normal(kx, (batch, nin), jnp.float32)
    out = jax.block_until_ready(mlp_forward(x, params))
    ref = mlp_reference(x, params)
    assert out.shape == (batch, nout)
    assert jnp.allclose(out, ref, atol=1e-5, rtol=1e-5), "fp32 mismatch vs reference"

    # 2) ragged batch exercising the balanced batch grid + pipelining
    batch2 = 300
    x2 = jax.random.normal(kx2, (batch2, nin), jnp.float32)
    out2 = jax.block_until_ready(mlp_forward(x2, params, block_rows=128))
    ref2 = mlp_reference(x2, params)
    assert out2.shape == (batch2, nout)
    assert jnp.allclose(out2, ref2, atol=1e-5, rtol=1e-5), "tiled fp32 mismatch"

    # 3) bf16 weights + bf16-streamed activations, fp32 MXU accumulation
    out_bf16 = jax.block_until_ready(
        mlp_forward(x2, params, block_rows=128, weight_dtype=jnp.bfloat16))
    assert out_bf16.shape == (batch2, nout)
    assert jnp.allclose(out_bf16, ref2, atol=5e-2, rtol=5e-2), "bf16 mismatch"

    print("KERNEL_OK")
</pallas_src>

<mosaic_0001>
module attributes {stable_mosaic.version = 11 : i64} {
  func.func @mlp_kernel(%arg0: i32, %arg1: memref<8x4xf32, #tpu.memory_space<vmem>>, %arg2: memref<4x32xf32, #tpu.memory_space<vmem>>, %arg3: memref<1x32xf32, #tpu.memory_space<vmem>>, %arg4: memref<32x32xf32, #tpu.memory_space<vmem>>, %arg5: memref<1x32xf32, #tpu.memory_space<vmem>>, %arg6: memref<32x32xf32, #tpu.memory_space<vmem>>, %arg7: memref<1x32xf32, #tpu.memory_space<vmem>>, %arg8: memref<32x4xf32, #tpu.memory_space<vmem>>, %arg9: memref<1x4xf32, #tpu.memory_space<vmem>>, %arg10: memref<8x4xf32, #tpu.memory_space<vmem>>) attributes {dimension_semantics = [#tpu.dimension_semantics<parallel>], iteration_bounds = array<i64: 1>, scalar_prefetch = 0 : i64, scratch_operands = 0 : i64, tpu.core_type = #tpu.core_type<tc>, window_params = [{transform_indices = @transform_0, window_bounds = array<i64: 8, 4>}, {pipeline_mode = #tpu.pipeline_mode<synchronous>, transform_indices = @transform_1, window_bounds = array<i64: 4, 32>}, {pipeline_mode = #tpu.pipeline_mode<synchronous>, transform_indices = @transform_2, window_bounds = array<i64: 1, 32>}, {pipeline_mode = #tpu.pipeline_mode<synchronous>, transform_indices = @transform_3, window_bounds = array<i64: 32, 32>}, {pipeline_mode = #tpu.pipeline_mode<synchronous>, transform_indices = @transform_4, window_bounds = array<i64: 1, 32>}, {pipeline_mode = #tpu.pipeline_mode<synchronous>, transform_indices = @transform_5, window_bounds = array<i64: 32, 32>}, {pipeline_mode = #tpu.pipeline_mode<synchronous>, transform_indices = @transform_6, window_bounds = array<i64: 1, 32>}, {pipeline_mode = #tpu.pipeline_mode<synchronous>, transform_indices = @transform_7, window_bounds = array<i64: 32, 4>}, {pipeline_mode = #tpu.pipeline_mode<synchronous>, transform_indices = @transform_8, window_bounds = array<i64: 1, 4>}, {transform_indices = @transform_9, window_bounds = array<i64: 8, 4>}]} {
    %c0 = arith.constant 0 : index
    %c0_0 = arith.constant 0 : index
    %0 = vector.load %arg1[%c0, %c0_0] : memref<8x4xf32, #tpu.memory_space<vmem>>, vector<8x4xf32>
    %c0_1 = arith.constant 0 : index
    %c0_2 = arith.constant 0 : index
    %1 = vector.load %arg2[%c0_1, %c0_2] : memref<4x32xf32, #tpu.memory_space<vmem>>, vector<4x32xf32>
    %cst = arith.constant dense<0.000000e+00> : vector<8x32xf32>
    %2 = tpu.matmul %0, %1, %cst {dimension_numbers = #tpu.dot_dimension_numbers<[1], [0], [0], [1], [0, 0, 1, 1], [], []>} : vector<8x4xf32>, vector<4x32xf32>, vector<8x32xf32> -> vector<8x32xf32>
    %c0_3 = arith.constant 0 : index
    %c0_4 = arith.constant 0 : index
    %3 = vector.load %arg3[%c0_3, %c0_4] : memref<1x32xf32, #tpu.memory_space<vmem>>, vector<1x32xf32>
    %4 = vector.broadcast %3 : vector<1x32xf32> to vector<8x32xf32>
    %5 = arith.addf %2, %4 : vector<8x32xf32>
    %cst_5 = arith.constant 0.000000e+00 : f32
    %6 = vector.broadcast %cst_5 : f32 to vector<8x32xf32>
    %7 = arith.cmpf ogt, %5, %6 : vector<8x32xf32>
    %cst_6 = arith.constant 2.000000e-01 : f32
    %8 = vector.broadcast %cst_6 : f32 to vector<8x32xf32>
    %9 = arith.mulf %8, %5 : vector<8x32xf32>
    %10 = arith.select %7, %5, %9 : vector<8x32xi1>, vector<8x32xf32>
    %c0_7 = arith.constant 0 : index
    %c0_8 = arith.constant 0 : index
    %11 = vector.load %arg4[%c0_7, %c0_8] : memref<32x32xf32, #tpu.memory_space<vmem>>, vector<32x32xf32>
    %cst_9 = arith.constant dense<0.000000e+00> : vector<8x32xf32>
    %12 = tpu.matmul %10, %11, %cst_9 {dimension_numbers = #tpu.dot_dimension_numbers<[1], [0], [0], [1], [0, 0, 1, 1], [], []>} : vector<8x32xf32>, vector<32x32xf32>, vector<8x32xf32> -> vector<8x32xf32>
    %c0_10 = arith.constant 0 : index
    %c0_11 = arith.constant 0 : index
    %13 = vector.load %arg5[%c0_10, %c0_11] : memref<1x32xf32, #tpu.memory_space<vmem>>, vector<1x32xf32>
    %14 = vector.broadcast %13 : vector<1x32xf32> to vector<8x32xf32>
    %15 = arith.addf %12, %14 : vector<8x32xf32>
    %cst_12 = arith.constant 0.000000e+00 : f32
    %16 = vector.broadcast %cst_12 : f32 to vector<8x32xf32>
    %17 = arith.cmpf ogt, %15, %16 : vector<8x32xf32>
    %cst_13 = arith.constant 2.000000e-01 : f32
    %18 = vector.broadcast %cst_13 : f32 to vector<8x32xf32>
    %19 = arith.mulf %18, %15 : vector<8x32xf32>
    %20 = arith.select %17, %15, %19 : vector<8x32xi1>, vector<8x32xf32>
    %c0_14 = arith.constant 0 : index
    %c0_15 = arith.constant 0 : index
    %21 = vector.load %arg6[%c0_14, %c0_15] : memref<32x32xf32, #tpu.memory_space<vmem>>, vector<32x32xf32>
    %cst_16 = arith.constant dense<0.000000e+00> : vector<8x32xf32>
    %22 = tpu.matmul %20, %21, %cst_16 {dimension_numbers = #tpu.dot_dimension_numbers<[1], [0], [0], [1], [0, 0, 1, 1], [], []>} : vector<8x32xf32>, vector<32x32xf32>, vector<8x32xf32> -> vector<8x32xf32>
    %c0_17 = arith.constant 0 : index
    %c0_18 = arith.constant 0 : index
    %23 = vector.load %arg7[%c0_17, %c0_18] : memref<1x32xf32, #tpu.memory_space<vmem>>, vector<1x32xf32>
    %24 = vector.broadcast %23 : vector<1x32xf32> to vector<8x32xf32>
    %25 = arith.addf %22, %24 : vector<8x32xf32>
    %cst_19 = arith.constant 0.000000e+00 : f32
    %26 = vector.broadcast %cst_19 : f32 to vector<8x32xf32>
    %27 = arith.cmpf ogt, %25, %26 : vector<8x32xf32>
    %cst_20 = arith.constant 2.000000e-01 : f32
    %28 = vector.broadcast %cst_20 : f32 to vector<8x32xf32>
    %29 = arith.mulf %28, %25 : vector<8x32xf32>
    %30 = arith.select %27, %25, %29 : vector<8x32xi1>, vector<8x32xf32>
    %c0_21 = arith.constant 0 : index
    %c0_22 = arith.constant 0 : index
    %31 = vector.load %arg8[%c0_21, %c0_22] : memref<32x4xf32, #tpu.memory_space<vmem>>, vector<32x4xf32>
    %cst_23 = arith.constant dense<0.000000e+00> : vector<8x4xf32>
    %32 = tpu.matmul %30, %31, %cst_23 {dimension_numbers = #tpu.dot_dimension_numbers<[1], [0], [0], [1], [0, 0, 1, 1], [], []>} : vector<8x32xf32>, vector<32x4xf32>, vector<8x4xf32> -> vector<8x4xf32>
    %c0_24 = arith.constant 0 : index
    %c0_25 = arith.constant 0 : index
    %33 = vector.load %arg9[%c0_24, %c0_25] : memref<1x4xf32, #tpu.memory_space<vmem>>, vector<1x4xf32>
    %34 = vector.broadcast %33 : vector<1x4xf32> to vector<8x4xf32>
    %35 = arith.addf %32, %34 : vector<8x4xf32>
    %c0_26 = arith.constant 0 : index
    %c0_27 = arith.constant 0 : index
    %36 = vector.load %arg10[%c0_26, %c0_27] : memref<8x4xf32, #tpu.memory_space<vmem>>, vector<8x4xf32>
    tpu.vector_store %arg10[%c0_26, %c0_27], %35 {strides = array<i32>} : memref<8x4xf32, #tpu.memory_space<vmem>>, vector<8x4xf32>,
    return
  }
  func.func @transform_0(%arg0: i32) -> (i32, i32) {
    %c0_i32 = arith.constant 0 : i32
    %c0_i32_0 = arith.constant 0 : i32
    return %arg0, %c0_i32 : i32, i32
  }
  func.func @transform_1(%arg0: i32) -> (i32, i32) {
    %c0_i32 = arith.constant 0 : i32
    %c0_i32_0 = arith.constant 0 : i32
    %c0_i32_1 = arith.constant 0 : i32
    return %c0_i32, %c0_i32_0 : i32, i32
  }
  func.func @transform_2(%arg0: i32) -> (i32, i32) {
    %c0_i32 = arith.constant 0 : i32
    %c0_i32_0 = arith.constant 0 : i32
    %c0_i32_1 = arith.constant 0 : i32
    return %c0_i32, %c0_i32_0 : i32, i32
  }
  func.func @transform_3(%arg0: i32) -> (i32, i32) {
    %c0_i32 = arith.constant 0 : i32
    %c0_i32_0 = arith.constant 0 : i32
    %c0_i32_1 = arith.constant 0 : i32
    return %c0_i32, %c0_i32_0 : i32, i32
  }
  func.func @transform_4(%arg0: i32) -> (i32, i32) {
    %c0_i32 = arith.constant 0 : i32
    %c0_i32_0 = arith.constant 0 : i32
    %c0_i32_1 = arith.constant 0 : i32
    return %c0_i32, %c0_i32_0 : i32, i32
  }
  func.func @transform_5(%arg0: i32) -> (i32, i32) {
    %c0_i32 = arith.constant 0 : i32
    %c0_i32_0 = arith.constant 0 : i32
    %c0_i32_1 = arith.constant 0 : i32
    return %c0_i32, %c0_i32_0 : i32, i32
  }
  func.func @transform_6(%arg0: i32) -> (i32, i32) {
    %c0_i32 = arith.constant 0 : i32
    %c0_i32_0 = arith.constant 0 : i32
    %c0_i32_1 = arith.constant 0 : i32
    return %c0_i32, %c0_i32_0 : i32, i32
  }
  func.func @transform_7(%arg0: i32) -> (i32, i32) {
    %c0_i32 = arith.constant 0 : i32
    %c0_i32_0 = arith.constant 0 : i32
    %c0_i32_1 = arith.constant 0 : i32
    return %c0_i32, %c0_i32_0 : i32, i32
  }
  func.func @transform_8(%arg0: i32) -> (i32, i32) {
    %c0_i32 = arith.constant 0 : i32
    %c0_i32_0 = arith.constant 0 : i32
    %c0_i32_1 = arith.constant 0 : i32
    return %c0_i32, %c0_i32_0 : i32, i32
  }
  func.func @transform_9(%arg0: i32) -> (i32, i32) {
    %c0_i32 = arith.constant 0 : i32
    %c0_i32_0 = arith.constant 0 : i32
    return %arg0, %c0_i32 : i32, i32
  }
}

</mosaic_0001>

<llo_original>
// kernel: tpu_custom_call.1
$region0: #{tpu_custom_call.1}
  #allocation0 [shape = 'u32[]', space=smem, size = 0x4, offset = 0x4, fixed_abs, tag = 'smem constant byte address 0x4 - core index']
  #allocation1 [shape = 'u32[72,128]{1,0:T(1,128)}', space=vmem, size = 0x9000, scoped, tag = 'internal scratch']
  %s0 = inlined_call_operand.vmem [shape: f32[8,4], index: 0, kind: input, shape index: {}]
  %s1 = inlined_call_operand.vmem [shape: f32[4,32], index: 1, kind: input, shape index: {}]
  %s2 = inlined_call_operand.vmem [shape: f32[1,32], index: 2, kind: input, shape index: {}]
  %s3 = inlined_call_operand.vmem [shape: f32[32,32], index: 3, kind: input, shape index: {}]
  %s4 = inlined_call_operand.vmem [shape: f32[1,32], index: 4, kind: input, shape index: {}]
  %s5 = inlined_call_operand.hbm [shape: f32[32,32], index: 5, kind: input, shape index: {}]
  %s6 = inlined_call_operand.vmem [shape: f32[1,32], index: 6, kind: input, shape index: {}]
  %s7 = inlined_call_operand.vmem [shape: f32[32,4], index: 7, kind: input, shape index: {}]
  %s8 = inlined_call_operand.vmem [shape: f32[1,4], index: 8, kind: input, shape index: {}]
  %s9 = inlined_call_operand.vmem [shape: f32[8,4], index: 9, kind: output, shape index: {}]
  %s10 = sld [smem:[#allocation0]]
  $region50: #{tpu_custom_call.1} parent=0
    _
  %s12 = ssub.s32 1, %s10
  %s13 = scalar_select 0, %s12, %s10
  $region1: #{tpu_custom_call.1} parent=0
    #allocation2 [shape = 'u8[16384]{0}', space=vmem, size = 0x4000, scoped, tag = 'input window, operand 5, single buffered']
    #allocation3 [shape = 's32[1]{0}', space=sflag, size = 0x4, scoped, tag = 'scoped memory for tpu_custom_call.1']
    %14 = vsyncpa [#allocation3], 0
    // Predicated region
    $region2: #{tpu_custom_call.1} parent=1 // pred_check
      _
    $region3: #{tpu_custom_call.1} parent=1 // pred_check_branch
      %16 = sbr.rel (0) target = $region5
    $region4: #{tpu_custom_call.1} parent=1 // pred_region
      _
    $region5: #{tpu_custom_call.1} parent=1 // pred_fallthru
      _
    // Predicated region
    $region6: #{tpu_custom_call.1} parent=1 // pred_check
      _
    $region7: #{tpu_custom_call.1} parent=1 // pred_check_branch
      %18 = sbr.rel (0) target = $region9
    $region8: #{tpu_custom_call.1} parent=1 // pred_region
      _
    $region9: #{tpu_custom_call.1} parent=1 // pred_fallthru
      _
    // Predicated region
    $region10: #{tpu_custom_call.1} parent=1 // pred_check
      _
    $region11: #{tpu_custom_call.1} parent=1 // pred_check_branch
      %20 = sbr.rel (0) target = $region13
    $region12: #{tpu_custom_call.1} parent=1 // pred_region
      _
    $region13: #{tpu_custom_call.1} parent=1 // pred_fallthru
      _
    // Predicated region
    $region14: #{tpu_custom_call.1} parent=1 // pred_check
      _
    $region15: #{tpu_custom_call.1} parent=1 // pred_check_branch
      %22 = sbr.rel (0) target = $region17
    $region16: #{tpu_custom_call.1} parent=1 // pred_region
      _
    $region17: #{tpu_custom_call.1} parent=1 // pred_fallthru
      _
    // Predicated region
    $region18: #{tpu_custom_call.1} parent=1 // pred_check
      _
    $region19: #{tpu_custom_call.1} parent=1 // pred_check_branch
      %24 = sbr.rel (0) target = $region21
    $region20: #{tpu_custom_call.1} parent=1 // pred_region
      _
    $region21: #{tpu_custom_call.1} parent=1 // pred_fallthru
      _
    // Predicated region
    $region22: #{tpu_custom_call.1} parent=1 // pred_check
      _
    $region23: #{tpu_custom_call.1} parent=1 // pred_check_branch
      %26 = sbr.rel (0) target = $region25
    $region24: #{tpu_custom_call.1} parent=1 // pred_region
      %28 = vsyncadd [#allocation3], 0
      %s29 = sshll.u32 %s5, 4
      %s30 = int_to_ptr.hbm [resolvable:$true] %s29
      %s31 = sshll.u32 [#allocation2], 4
      %s32 = int_to_ptr.vmem [resolvable:$true] %s31
      %37 = dma.hbm_to_vmem [thread:$0]  %s30, 512, %s32, [#allocation3], 128, 128, 8
    $region25: #{tpu_custom_call.1} parent=1 // pred_fallthru
      _
    // Predicated region
    $region26: #{tpu_custom_call.1} parent=1 // pred_check
      _
    $region27: #{tpu_custom_call.1} parent=1 // pred_check_branch
      %39 = sbr.rel (0) target = $region29
    $region28: #{tpu_custom_call.1} parent=1 // pred_region
      _
    $region29: #{tpu_custom_call.1} parent=1 // pred_fallthru
      _
    // Predicated region
    $region30: #{tpu_custom_call.1} parent=1 // pred_check
      _
    $region31: #{tpu_custom_call.1} parent=1 // pred_check_branch
      %41 = sbr.rel (0) target = $region33
    $region32: #{tpu_custom_call.1} parent=1 // pred_region
      _
    $region33: #{tpu_custom_call.1} parent=1 // pred_fallthru
      _
    // Predicated region
    $region34: #{tpu_custom_call.1} parent=1 // pred_check
      _
    $region35: #{tpu_custom_call.1} parent=1 // pred_check_branch
      %43 = sbr.rel (0) target = $region37
    $region36: #{tpu_custom_call.1} parent=1 // pred_region
      _
    $region37: #{tpu_custom_call.1} parent=1 // pred_fallthru
      _
    // Predicated region
    $region38: #{tpu_custom_call.1} parent=1 // pred_check
      _
    $region39: #{tpu_custom_call.1} parent=1 // pred_check_branch
      %45 = sbr.rel (0) target = $region41
    $region40: #{tpu_custom_call.1} parent=1 // pred_region
      %47 = dma.done [#allocation3], 512
    $region41: #{tpu_custom_call.1} parent=1 // pred_fallthru
      _
    %v48 = vld [vmem:[%s0] sm:$0xff]
    %v49 = vld [vmem:[%s1] sm:$0xf]
    %v50 = vld [vmem:[%s2] sm:$0x1]
    %v52 = vperm.slane %v50, 0
    %vm54 = vcmask 31744
    %v56 = vsel %vm54, %v48, 0
    %vm58 = vcmask 1043456
    %v60 = vsel %vm58, %v49, 0
    %62 = vmatpush.msra.mxu0 0.0
    %63 = vmatpush.msra.mxu0 0.0
    %64 = vmatpush.msra.mxu0 0.0
    %65 = vmatpush.msra.mxu0 0.0
    %66 = vmatpush.msra.mxu0 0.0
    %67 = vmatpush.msra.mxu0 0.0
    %68 = vmatpush.msra.mxu0 0.0
    %69 = vmatpush.msra.mxu0 0.0
    %70 = vmatpush.msra.mxu0 0.0
    %71 = vmatpush.msra.mxu0 0.0
    %72 = vmatpush.msra.mxu0 0.0
    %73 = vmatpush.msra.mxu0 0.0
    %74 = vmatpush.msra.mxu0 0.0
    %75 = vmatpush.msra.mxu0 0.0
    %76 = vmatpush.msra.mxu0 0.0
    %77 = vmatpush.msra.mxu0 %v60
    %78 = vmatmul.f32.gmra.mxu0 %v56
    %v79 = vpop.f32.mrf.mxu0
    %v80 = vadd.f32 %v52, %v79
    %81 = vdwg.mxu0
    %vm82 = vcmp.gt.f32.partialorder %v80, 0.0
    %v83 = vmul.f32 %v80, 0.2
    %v84 = vsel %vm82, %v80, %v83
    %v85 = vld [vmem:[%s3] sm:$0xff]
    %v86 = vld [vmem:[%s3 + $0x8] sm:$0xff]
    %v87 = vld [vmem:[%s3 + $0x10] sm:$0xff]
    %v88 = vld [vmem:[%s3 + $0x18] sm:$0xff]
    %v89 = vld [vmem:[%s4] sm:$0x1]
    %v91 = vperm.slane %v89, 0
    %vm93 = vcmask 261120
    %v95 = vsel %vm93, %v84, 0
    %97 = vmatpush.msra.mxu0 0.0
    %98 = vmatpush.msra.mxu0 0.0
    %99 = vmatpush.msra.mxu0 0.0
    %100 = vmatpush.msra.mxu0 0.0
    %101 = vmatpush.msra.mxu0 0.0
    %102 = vmatpush.msra.mxu0 0.0
    %103 = vmatpush.msra.mxu0 0.0
    %104 = vmatpush.msra.mxu0 0.0
    %105 = vmatpush.msra.mxu0 0.0
    %106 = vmatpush.msra.mxu0 0.0
    %107 = vmatpush.msra.mxu0 0.0
    %108 = vmatpush.msra.mxu0 0.0
    %109 = vmatpush.msra.mxu0 %v88
    %110 = vmatpush.msra.mxu0 %v87
    %111 = vmatpush.msra.mxu0 %v86
    %112 = vmatpush.msra.mxu0 %v85
    %113 = vmatmul.f32.gmra.mxu0 %v95
    %v114 = vpop.f32.mrf.mxu0
    %v115 = vadd.f32 %v91, %v114
    %116 = vdwg.mxu0
    %vm117 = vcmp.gt.f32.partialorder %v115, 0.0
    %v118 = vmul.f32 %v115, 0.2
    %v119 = vsel %vm117, %v115, %v118
    %v120 = vld [vmem:[#allocation2] sm:$0xff]
    %v121 = vld [vmem:[#allocation2 + $0x8] sm:$0xff]
    %v122 = vld [vmem:[#allocation2 + $0x10] sm:$0xff]
    %v123 = vld [vmem:[#allocation2 + $0x18] sm:$0xff]
    %v124 = vld [vmem:[%s6] sm:$0x1]
    %v126 = vperm.slane %v124, 0
    %v129 = vsel %vm93, %v119, 0
    %131 = vmatpush.msra.mxu0 0.0
    %132 = vmatpush.msra.mxu0 0.0
    %133 = vmatpush.msra.mxu0 0.0
    %134 = vmatpush.msra.mxu0 0.0
    %135 = vmatpush.msra.mxu0 0.0
    %136 = vmatpush.msra.mxu0 0.0
    %137 = vmatpush.msra.mxu0 0.0
    %138 = vmatpush.msra.mxu0 0.0
    %139 = vmatpush.msra.mxu0 0.0
    %140 = vmatpush.msra.mxu0 0.0
    %141 = vmatpush.msra.mxu0 0.0
    %142 = vmatpush.msra.mxu0 0.0
    %143 = vmatpush.msra.mxu0 %v123
    %144 = vmatpush.msra.mxu0 %v122
    %145 = vmatpush.msra.mxu0 %v121
    %146 = vmatpush.msra.mxu0 %v120
    %147 = vmatmul.f32.gmra.mxu0 %v129
    %v148 = vpop.f32.mrf.mxu0
    %v149 = vadd.f32 %v126, %v148
    %150 = vdwg.mxu0
    %vm151 = vcmp.gt.f32.partialorder %v149, 0.0
    %v152 = vmul.f32 %v149, 0.2
    %v153 = vsel %vm151, %v149, %v152
    %v154 = vld [vmem:[%s7] sm:$0xff]
    %v155 = vld [vmem:[%s7 + $0x8] sm:$0xff]
    %v156 = vld [vmem:[%s7 + $0x10] sm:$0xff]
    %v157 = vld [vmem:[%s7 + $0x18] sm:$0xff]
    %v158 = vld [vmem:[%s8] sm:$0x1]
    %v160 = vperm.slane %v158, 0
    %v163 = vsel %vm93, %v153, 0
    %165 = vmatpush.msra.mxu0 0.0
    %166 = vmatpush.msra.mxu0 0.0
    %167 = vmatpush.msra.mxu0 0.0
    %168 = vmatpush.msra.mxu0 0.0
    %169 = vmatpush.msra.mxu0 0.0
    %170 = vmatpush.msra.mxu0 0.0
    %171 = vmatpush.msra.mxu0 0.0
    %172 = vmatpush.msra.mxu0 0.0
    %173 = vmatpush.msra.mxu0 0.0
    %174 = vmatpush.msra.mxu0 0.0
    %175 = vmatpush.msra.mxu0 0.0
    %176 = vmatpush.msra.mxu0 0.0
    %177 = vmatpush.msra.mxu0 %v157
    %178 = vmatpush.msra.mxu0 %v156
    %179 = vmatpush.msra.mxu0 %v155
    %180 = vmatpush.msra.mxu0 %v154
    %181 = vmatmul.f32.gmra.mxu0 %v163
    %v182 = vpop.f32.mrf.mxu0
    %v183 = vadd.f32 %v160, %v182
    %184 = vdwg.mxu0
    %185 = vst.msk [vmem:[%s9] sm:$0xff] %vm54, %v183
    // Predicated region
    $region42: #{tpu_custom_call.1} parent=1 // pred_check
      _
    $region43: #{tpu_custom_call.1} parent=1 // pred_check_branch
      %187 = sbr.rel (0) target = $region45
    $region44: #{tpu_custom_call.1} parent=1 // pred_region
      _
    $region45: #{tpu_custom_call.1} parent=1 // pred_fallthru
      _
    // Predicated region
    $region46: #{tpu_custom_call.1} parent=1 // pred_check
      _
    $region47: #{tpu_custom_call.1} parent=1 // pred_check_branch
      %189 = sbr.rel (0) target = $region49
    $region48: #{tpu_custom_call.1} parent=1 // pred_region
      _
    $region49: #{tpu_custom_call.1} parent=1 // pred_fallthru
      _
    %190 = vsyncpa [#allocation3], 1

</llo_original>
